<compile_context>
chip_gen: v7x
topology: tpu7x:2x2x1
jax: 0.10.0
libtpu: 0.0.40
codegen_flags: <defaults>
</compile_context>

<pallas_src>
import functools

import jax
import jax.numpy as jnp
from jax.experimental import pallas as pl
from jax.experimental.pallas import tpu as pltpu


def matmul_sub_bias_kernel(x_ref, w_ref, b_ref, o_ref):
    # One MXU pass (f32 accumulate, HIGHEST precision) + fused VPU bias subtract.
    acc = jax.lax.dot_general(
        x_ref[...],
        w_ref[...],
        dimension_numbers=(((1,), (0,)), ((), ())),
        preferred_element_type=jnp.float32,
        precision=jax.lax.Precision.HIGHEST,
    )
    o_ref[...] = (acc - b_ref[...]).astype(o_ref.dtype)


@functools.partial(jax.jit, static_argnames=())
def matmul_sub_bias(x1, weight, bias):
    M, K = x1.shape
    K2, N = weight.shape
    assert K == K2

    # (1, N) bias so the in-kernel broadcast is a plain 2-D VPU broadcast.
    b2 = bias.reshape(1, N)

    cost = pl.CostEstimate(
        flops=2 * M * K * N,
        bytes_accessed=(M * K + K * N + M * N + N) * 4,
        transcendentals=0,
    )

    return pl.pallas_call(
        matmul_sub_bias_kernel,
        out_shape=jax.ShapeDtypeStruct((M, N), x1.dtype),
        # Single block, no grid: whole problem fits in VMEM; nothing to
        # pipeline at this size (latency-bound).
        in_specs=[
            pl.BlockSpec(memory_space=pltpu.MemorySpace.VMEM),
            pl.BlockSpec(memory_space=pltpu.MemorySpace.VMEM),
            pl.BlockSpec(memory_space=pltpu.MemorySpace.VMEM),
        ],
        out_specs=pl.BlockSpec(memory_space=pltpu.MemorySpace.VMEM),
        cost_estimate=cost,
    )(x1, weight, b2)


if __name__ == "__main__":
    key = jax.random.PRNGKey(0)
    k1, k2, k3 = jax.random.split(key, 3)

    # Shapes implied by the module's forward: x1 (128,45), weight (45,10), bias (10,)
    x1 = jax.random.normal(k1, (128, 45), dtype=jnp.float32)
    weight = jax.random.normal(k2, (45, 10), dtype=jnp.float32)
    bias = jax.random.normal(k3, (10,), dtype=jnp.float32)

    out = matmul_sub_bias(x1, weight, bias)
    out = jax.block_until_ready(out)

    # sanity check against pure-JAX reference
    ref = jnp.matmul(x1, weight) - bias
    assert out.shape == (128, 10)
    assert jnp.allclose(out, ref, atol=1e-4, rtol=1e-4)

    print("KERNEL_OK")
</pallas_src>

<mosaic_0001>
module attributes {stable_mosaic.version = 11 : i64} {
  func.func @matmul_sub_bias_kernel(%arg0: memref<128x45xf32, #tpu.memory_space<vmem>>, %arg1: memref<45x10xf32, #tpu.memory_space<vmem>>, %arg2: memref<1x10xf32, #tpu.memory_space<vmem>>, %arg3: memref<128x10xf32, #tpu.memory_space<vmem>>) attributes {dimension_semantics = [], scalar_prefetch = 0 : i64, scratch_operands = 0 : i64, tpu.core_type = #tpu.core_type<tc>} {
    %c0 = arith.constant 0 : index
    %c0_0 = arith.constant 0 : index
    %0 = vector.load %arg0[%c0, %c0_0] : memref<128x45xf32, #tpu.memory_space<vmem>>, vector<128x45xf32>
    %c0_1 = arith.constant 0 : index
    %c0_2 = arith.constant 0 : index
    %1 = vector.load %arg1[%c0_1, %c0_2] : memref<45x10xf32, #tpu.memory_space<vmem>>, vector<45x10xf32>
    %cst = arith.constant dense<0.000000e+00> : vector<128x10xf32>
    %2 = tpu.matmul %0, %1, %cst {dimension_numbers = #tpu.dot_dimension_numbers<[1], [0], [0], [1], [0, 0, 1, 1], [], []>, precision = #tpu.contract_precision<fp32>} : vector<128x45xf32>, vector<45x10xf32>, vector<128x10xf32> -> vector<128x10xf32>
    %c0_3 = arith.constant 0 : index
    %c0_4 = arith.constant 0 : index
    %3 = vector.load %arg2[%c0_3, %c0_4] : memref<1x10xf32, #tpu.memory_space<vmem>>, vector<1x10xf32>
    %4 = vector.broadcast %3 : vector<1x10xf32> to vector<128x10xf32>
    %5 = arith.subf %2, %4 : vector<128x10xf32>
    %c0_5 = arith.constant 0 : index
    %c0_6 = arith.constant 0 : index
    %6 = vector.load %arg3[%c0_5, %c0_6] : memref<128x10xf32, #tpu.memory_space<vmem>>, vector<128x10xf32>
    tpu.vector_store %arg3[%c0_5, %c0_6], %5 {strides = array<i32>} : memref<128x10xf32, #tpu.memory_space<vmem>>, vector<128x10xf32>,
    return
  }
}

</mosaic_0001>

<llo_original>
// kernel: matmul_sub_bias.1
$region0: #{matmul_sub_bias.1}
  #allocation0 [shape = 'u32[]', space=smem, size = 0x4, offset = 0x4, fixed_abs, tag = 'smem constant byte address 0x4 - core index']
  #allocation1 [shape = 'u32[144,128]{1,0:T(1,128)}', space=vmem, size = 0x12000, scoped, tag = 'internal scratch']
  %s0 = inlined_call_operand.vmem [shape: f32[128,45], index: 0, kind: input, shape index: {}]
  %s1 = inlined_call_operand.vmem [shape: f32[45,10], index: 1, kind: input, shape index: {}]
  %s2 = inlined_call_operand.vmem [shape: f32[1,10], index: 2, kind: input, shape index: {}]
  %s3 = inlined_call_operand.vmem [shape: f32[128,10], index: 3, kind: output, shape index: {}]
  %s4 = sld [smem:[#allocation0]]
  $region22: #{matmul_sub_bias.1} parent=0
    _
  %s6 = ssub.s32 1, %s4
  %s7 = scalar_select 0, %s6, %s4
  // Predicated region
  $region2: #{matmul_sub_bias.1} parent=0 // pred_check
    _
  $region3: #{matmul_sub_bias.1} parent=0 // pred_check_branch
    %9 = sbr.rel (0) target = $region5
  $region4: #{matmul_sub_bias.1} parent=0 // pred_region
    _
  $region5: #{matmul_sub_bias.1} parent=0 // pred_fallthru
    _
  // Predicated region
  $region6: #{matmul_sub_bias.1} parent=0 // pred_check
    _
  $region7: #{matmul_sub_bias.1} parent=0 // pred_check_branch
    %11 = sbr.rel (0) target = $region9
  $region8: #{matmul_sub_bias.1} parent=0 // pred_region
    _
  $region9: #{matmul_sub_bias.1} parent=0 // pred_fallthru
    _
  // Predicated region
  $region10: #{matmul_sub_bias.1} parent=0 // pred_check
    _
  $region11: #{matmul_sub_bias.1} parent=0 // pred_check_branch
    %13 = sbr.rel (0) target = $region13
  $region12: #{matmul_sub_bias.1} parent=0 // pred_region
    _
  $region13: #{matmul_sub_bias.1} parent=0 // pred_fallthru
    _
  %v14 = vld [vmem:[%s0] sm:$0xff]
  %v15 = vld [vmem:[%s0 + $0x8] sm:$0xff]
  %v16 = vld [vmem:[%s0 + $0x10] sm:$0xff]
  %v17 = vld [vmem:[%s0 + $0x18] sm:$0xff]
  %v18 = vld [vmem:[%s0 + $0x20] sm:$0xff]
  %v19 = vld [vmem:[%s0 + $0x28] sm:$0xff]
  %v20 = vld [vmem:[%s0 + $0x30] sm:$0xff]
  %v21 = vld [vmem:[%s0 + $0x38] sm:$0xff]
  %v22 = vld [vmem:[%s0 + $0x40] sm:$0xff]
  %v23 = vld [vmem:[%s0 + $0x48] sm:$0xff]
  %v24 = vld [vmem:[%s0 + $0x50] sm:$0xff]
  %v25 = vld [vmem:[%s0 + $0x58] sm:$0xff]
  %v26 = vld [vmem:[%s0 + $0x60] sm:$0xff]
  %v27 = vld [vmem:[%s0 + $0x68] sm:$0xff]
  %v28 = vld [vmem:[%s0 + $0x70] sm:$0xff]
  %v29 = vld [vmem:[%s0 + $0x78] sm:$0xff]
  %v30 = vld [vmem:[%s1] sm:$0xff]
  %v31 = vld [vmem:[%s1 + $0x8] sm:$0xff]
  %v32 = vld [vmem:[%s1 + $0x10] sm:$0xff]
  %v33 = vld [vmem:[%s1 + $0x18] sm:$0xff]
  %v34 = vld [vmem:[%s1 + $0x20] sm:$0xff]
  %v35 = vld [vmem:[%s1 + $0x28] sm:$0x1f]
  %vm36 = vcmask 367616
  %v38 = vsel %vm36, %v14, 0
  %v41 = vsel %vm36, %v15, 0
  %v44 = vsel %vm36, %v16, 0
  %v47 = vsel %vm36, %v17, 0
  %v50 = vsel %vm36, %v18, 0
  %v53 = vsel %vm36, %v19, 0
  %v56 = vsel %vm36, %v20, 0
  %v59 = vsel %vm36, %v21, 0
  %v62 = vsel %vm36, %v22, 0
  %v65 = vsel %vm36, %v23, 0
  %v68 = vsel %vm36, %v24, 0
  %v71 = vsel %vm36, %v25, 0
  %v74 = vsel %vm36, %v26, 0
  %v77 = vsel %vm36, %v27, 0
  %v80 = vsel %vm36, %v28, 0
  %v83 = vsel %vm36, %v29, 0
  %vm85 = vcmask 1044480
  %v87 = vsel %vm85, %v35, 0
  %89 = vmatprep.subr.mxu0 0.0
  %v90 = vand.u32 %v30, 4294901760
  %91 = vmatpush1.msra.mxu0 %v90
  %92 = vmatprep.subr.mxu0 0.0
  %v93 = vand.u32 %v31, 4294901760
  %94 = vmatpush1.msra.mxu0 %v93
  %95 = vmatprep.subr.mxu0 0.0
  %v96 = vand.u32 %v32, 4294901760
  %97 = vmatpush1.msra.mxu0 %v96
  %98 = vmatprep.subr.mxu0 0.0
  %v99 = vand.u32 %v33, 4294901760
  %100 = vmatpush1.msra.mxu0 %v99
  %101 = vmatprep.subr.mxu0 0.0
  %v102 = vand.u32 %v34, 4294901760
  %103 = vmatpush1.msra.mxu0 %v102
  %104 = vmatprep.subr.mxu0 0.0
  %v105 = vand.u32 %v87, 4294901760
  %106 = vmatpush1.msra.mxu0 %v105
  %107 = vmatprep.subr.mxu0 0.0
  %108 = vmatpush1.msra.mxu0 0.0
  %109 = vmatprep.subr.mxu0 0.0
  %110 = vmatpush1.msra.mxu0 0.0
  %111 = vmatprep.subr.mxu0 0.0
  %112 = vmatpush1.msra.mxu0 0.0
  %113 = vmatprep.subr.mxu0 0.0
  %114 = vmatpush1.msra.mxu0 0.0
  %115 = vmatprep.subr.mxu0 0.0
  %116 = vmatpush1.msra.mxu0 0.0
  %117 = vmatprep.subr.mxu0 0.0
  %118 = vmatpush1.msra.mxu0 0.0
  %119 = vmatprep.subr.mxu0 0.0
  %120 = vmatpush1.msra.mxu0 0.0
  %121 = vmatprep.subr.mxu0 0.0
  %122 = vmatpush1.msra.mxu0 0.0
  %123 = vmatprep.subr.mxu0 0.0
  %124 = vmatpush1.msra.mxu0 0.0
  %125 = vmatprep.subr.mxu0 0.0
  %126 = vmatpush1.msra.mxu0 0.0
  %127 = vmatprep.subr.mxu0 0.0
  %128 = vmatpush1.msra.mxu0 0.0
  %129 = vmatprep.subr.mxu0 0.0
  %130 = vmatpush1.msra.mxu0 0.0
  %131 = vmatprep.subr.mxu0 0.0
  %132 = vmatpush1.msra.mxu0 0.0
  %133 = vmatprep.subr.mxu0 0.0
  %134 = vmatpush1.msra.mxu0 0.0
  %135 = vmatprep.subr.mxu0 0.0
  %136 = vmatpush1.msra.mxu0 0.0
  %137 = vmatprep.subr.mxu0 0.0
  %138 = vmatpush1.msra.mxu0 0.0
  %139 = vmatprep.subr.mxu0 0.0
  %140 = vmatpush1.msra.mxu0 0.0
  %141 = vmatprep.subr.mxu0 0.0
  %142 = vmatpush1.msra.mxu0 0.0
  %143 = vmatprep.subr.mxu0 0.0
  %144 = vmatpush1.msra.mxu0 0.0
  %145 = vmatprep.subr.mxu0 0.0
  %146 = vmatpush1.msra.mxu0 0.0
  %147 = vmatprep.subr.mxu0 0.0
  %148 = vmatpush1.msra.mxu0 0.0
  %149 = vmatprep.subr.mxu0 0.0
  %150 = vmatpush1.msra.mxu0 0.0
  %151 = vmatprep.subr.mxu0 0.0
  %152 = vmatpush1.msra.mxu0 0.0
  %153 = vmatprep.subr.mxu0 0.0
  %154 = vmatpush1.msra.mxu0 0.0
  %155 = vmatprep.subr.mxu0 0.0
  %156 = vmatpush1.msra.mxu0 0.0
  %157 = vmatprep.subr.mxu0 0.0
  %158 = vmatpush1.msra.mxu0 0.0
  %159 = vmatprep.mubr.f32.mxu0 0.0
  %v160 = vand.u32 %v38, 4294901760
  %v161 = vsub.f32 %v38, %v160
  %v162 = vand.u32 %v161, 4294901760
  %v163 = vsub.f32 %v161, %v162
  %v164 = vand.u32 %v163, 4294901760
  %165 = vmatmul.mubr.f32.gmra.mrb[0].mxu0 %v164
  %v166 = vpop.f32.mrb[0].mxu0
  %v167 = vadd.f32 0.0, %v166
  %v168 = vpop.f32.mrb[0].mxu0
  %169 = vmatprep.mubr.f32.mxu0 0.0
  %v170 = vand.u32 %v41, 4294901760
  %v171 = vsub.f32 %v41, %v170
  %v172 = vand.u32 %v171, 4294901760
  %v173 = vsub.f32 %v171, %v172
  %v174 = vand.u32 %v173, 4294901760
  %175 = vmatmul.mubr.f32.gmra.mrb[0].mxu0 %v174
  %v176 = vpop.f32.mrb[0].mxu0
  %v177 = vadd.f32 0.0, %v176
  %v178 = vpop.f32.mrb[0].mxu0
  %179 = vmatprep.mubr.f32.mxu0 0.0
  %v180 = vand.u32 %v44, 4294901760
  %v181 = vsub.f32 %v44, %v180
  %v182 = vand.u32 %v181, 4294901760
  %v183 = vsub.f32 %v181, %v182
  %v184 = vand.u32 %v183, 4294901760
  %185 = vmatmul.mubr.f32.gmra.mrb[0].mxu0 %v184
  %v186 = vpop.f32.mrb[0].mxu0
  %v187 = vadd.f32 0.0, %v186
  %v188 = vpop.f32.mrb[0].mxu0
  %189 = vmatprep.mubr.f32.mxu0 0.0
  %v190 = vand.u32 %v47, 4294901760
  %v191 = vsub.f32 %v47, %v190
  %v192 = vand.u32 %v191, 4294901760
  %v193 = vsub.f32 %v191, %v192
  %v194 = vand.u32 %v193, 4294901760
  %195 = vmatmul.mubr.f32.gmra.mrb[0].mxu0 %v194
  %v196 = vpop.f32.mrb[0].mxu0
  %v197 = vadd.f32 0.0, %v196
  %v198 = vpop.f32.mrb[0].mxu0
  %199 = vmatprep.mubr.f32.mxu0 0.0
  %v200 = vand.u32 %v50, 4294901760
  %v201 = vsub.f32 %v50, %v200
  %v202 = vand.u32 %v201, 4294901760
  %v203 = vsub.f32 %v201, %v202
  %v204 = vand.u32 %v203, 4294901760
  %205 = vmatmul.mubr.f32.gmra.mrb[0].mxu0 %v204
  %v206 = vpop.f32.mrb[0].mxu0
  %v207 = vadd.f32 0.0, %v206
  %v208 = vpop.f32.mrb[0].mxu0
  %209 = vmatprep.mubr.f32.mxu0 0.0
  %v210 = vand.u32 %v53, 4294901760
  %v211 = vsub.f32 %v53, %v210
  %v212 = vand.u32 %v211, 4294901760
  %v213 = vsub.f32 %v211, %v212
  %v214 = vand.u32 %v213, 4294901760
  %215 = vmatmul.mubr.f32.gmra.mrb[0].mxu0 %v214
  %v216 = vpop.f32.mrb[0].mxu0
  %v217 = vadd.f32 0.0, %v216
  %v218 = vpop.f32.mrb[0].mxu0
  %219 = vmatprep.mubr.f32.mxu0 0.0
  %v220 = vand.u32 %v56, 4294901760
  %v221 = vsub.f32 %v56, %v220
  %v222 = vand.u32 %v221, 4294901760
  %v223 = vsub.f32 %v221, %v222
  %v224 = vand.u32 %v223, 4294901760
  %225 = vmatmul.mubr.f32.gmra.mrb[0].mxu0 %v224
  %v226 = vpop.f32.mrb[0].mxu0
  %v227 = vadd.f32 0.0, %v226
  %v228 = vpop.f32.mrb[0].mxu0
  %229 = vmatprep.mubr.f32.mxu0 0.0
  %v230 = vand.u32 %v59, 4294901760
  %v231 = vsub.f32 %v59, %v230
  %v232 = vand.u32 %v231, 4294901760
  %v233 = vsub.f32 %v231, %v232
  %v234 = vand.u32 %v233, 4294901760
  %235 = vmatmul.mubr.f32.gmra.mrb[0].mxu0 %v234
  %v236 = vpop.f32.mrb[0].mxu0
  %v237 = vadd.f32 0.0, %v236
  %v238 = vpop.f32.mrb[0].mxu0
  %239 = vmatprep.mubr.f32.mxu0 0.0
  %v240 = vand.u32 %v62, 4294901760
  %v241 = vsub.f32 %v62, %v240
  %v242 = vand.u32 %v241, 4294901760
  %v243 = vsub.f32 %v241, %v242
  %v244 = vand.u32 %v243, 4294901760
  %245 = vmatmul.mubr.f32.gmra.mrb[0].mxu0 %v244
  %v246 = vpop.f32.mrb[0].mxu0
  %v247 = vadd.f32 0.0, %v246
  %v248 = vpop.f32.mrb[0].mxu0
  %249 = vmatprep.mubr.f32.mxu0 0.0
  %v250 = vand.u32 %v65, 4294901760
  %v251 = vsub.f32 %v65, %v250
  %v252 = vand.u32 %v251, 4294901760
  %v253 = vsub.f32 %v251, %v252
  %v254 = vand.u32 %v253, 4294901760
  %255 = vmatmul.mubr.f32.gmra.mrb[0].mxu0 %v254
  %v256 = vpop.f32.mrb[0].mxu0
  %v257 = vadd.f32 0.0, %v256
  %v258 = vpop.f32.mrb[0].mxu0
  %259 = vmatprep.mubr.f32.mxu0 0.0
  %v260 = vand.u32 %v68, 4294901760
  %v261 = vsub.f32 %v68, %v260
  %v262 = vand.u32 %v261, 4294901760
  %v263 = vsub.f32 %v261, %v262
  %v264 = vand.u32 %v263, 4294901760
  %265 = vmatmul.mubr.f32.gmra.mrb[0].mxu0 %v264
  %v266 = vpop.f32.mrb[0].mxu0
  %v267 = vadd.f32 0.0, %v266
  %v268 = vpop.f32.mrb[0].mxu0
  %269 = vmatprep.mubr.f32.mxu0 0.0
  %v270 = vand.u32 %v71, 4294901760
  %v271 = vsub.f32 %v71, %v270
  %v272 = vand.u32 %v271, 4294901760
  %v273 = vsub.f32 %v271, %v272
  %v274 = vand.u32 %v273, 4294901760
  %275 = vmatmul.mubr.f32.gmra.mrb[0].mxu0 %v274
  %v276 = vpop.f32.mrb[0].mxu0
  %v277 = vadd.f32 0.0, %v276
  %v278 = vpop.f32.mrb[0].mxu0
  %279 = vmatprep.mubr.f32.mxu0 0.0
  %v280 = vand.u32 %v74, 4294901760
  %v281 = vsub.f32 %v74, %v280
  %v282 = vand.u32 %v281, 4294901760
  %v283 = vsub.f32 %v281, %v282
  %v284 = vand.u32 %v283, 4294901760
  %285 = vmatmul.mubr.f32.gmra.mrb[0].mxu0 %v284
  %v286 = vpop.f32.mrb[0].mxu0
  %v287 = vadd.f32 0.0, %v286
  %v288 = vpop.f32.mrb[0].mxu0
  %289 = vmatprep.mubr.f32.mxu0 0.0
  %v290 = vand.u32 %v77, 4294901760
  %v291 = vsub.f32 %v77, %v290
  %v292 = vand.u32 %v291, 4294901760
  %v293 = vsub.f32 %v291, %v292
  %v294 = vand.u32 %v293, 4294901760
  %295 = vmatmul.mubr.f32.gmra.mrb[0].mxu0 %v294
  %v296 = vpop.f32.mrb[0].mxu0
  %v297 = vadd.f32 0.0, %v296
  %v298 = vpop.f32.mrb[0].mxu0
  %299 = vmatprep.mubr.f32.mxu0 0.0
  %v300 = vand.u32 %v80, 4294901760
  %v301 = vsub.f32 %v80, %v300
  %v302 = vand.u32 %v301, 4294901760
  %v303 = vsub.f32 %v301, %v302
  %v304 = vand.u32 %v303, 4294901760
  %305 = vmatmul.mubr.f32.gmra.mrb[0].mxu0 %v304
  %v306 = vpop.f32.mrb[0].mxu0
  %v307 = vadd.f32 0.0, %v306
  %v308 = vpop.f32.mrb[0].mxu0
  %309 = vmatprep.mubr.f32.mxu0 0.0
  %v310 = vand.u32 %v83, 4294901760
  %v311 = vsub.f32 %v83, %v310
  %v312 = vand.u32 %v311, 4294901760
  %v313 = vsub.f32 %v311, %v312
  %v314 = vand.u32 %v313, 4294901760
  %315 = vmatmul.mubr.f32.gmra.mrb[0].mxu0 %v314
  %v316 = vpop.f32.mrb[0].mxu0
  %v317 = vadd.f32 0.0, %v316
  %v318 = vpop.f32.mrb[0].mxu0
  %319 = vdwg.mxu0
  %320 = vmatprep.subr.mxu0 0.0
  %v321 = vand.u32 %v30, 4294901760
  %v322 = vsub.f32 %v30, %v321
  %v323 = vand.u32 %v322, 4294901760
  %v324 = vsub.f32 %v322, %v323
  %v325 = vand.u32 %v324, 4294901760
  %326 = vmatpush1.msra.mxu0 %v325
  %327 = vmatprep.subr.mxu0 0.0
  %v328 = vand.u32 %v31, 4294901760
  %v329 = vsub.f32 %v31, %v328
  %v330 = vand.u32 %v329, 4294901760
  %v331 = vsub.f32 %v329, %v330
  %v332 = vand.u32 %v331, 4294901760
  %333 = vmatpush1.msra.mxu0 %v332
  %334 = vmatprep.subr.mxu0 0.0
  %v335 = vand.u32 %v32, 4294901760
  %v336 = vsub.f32 %v32, %v335
  %v337 = vand.u32 %v336, 4294901760
  %v338 = vsub.f32 %v336, %v337
  %v339 = vand.u32 %v338, 4294901760
  %340 = vmatpush1.msra.mxu0 %v339
  %341 = vmatprep.subr.mxu0 0.0
  %v342 = vand.u32 %v33, 4294901760
  %v343 = vsub.f32 %v33, %v342
  %v344 = vand.u32 %v343, 4294901760
  %v345 = vsub.f32 %v343, %v344
  %v346 = vand.u32 %v345, 4294901760
  %347 = vmatpush1.msra.mxu0 %v346
  %348 = vmatprep.subr.mxu0 0.0
  %v349 = vand.u32 %v34, 4294901760
  %v350 = vsub.f32 %v34, %v349
  %v351 = vand.u32 %v350, 4294901760
  %v352 = vsub.f32 %v350, %v351
  %v353 = vand.u32 %v352, 4294901760
  %354 = vmatpush1.msra.mxu0 %v353
  %355 = vmatprep.subr.mxu0 0.0
  %v356 = vand.u32 %v87, 4294901760
  %v357 = vsub.f32 %v87, %v356
  %v358 = vand.u32 %v357, 4294901760
  %v359 = vsub.f32 %v357, %v358
  %v360 = vand.u32 %v359, 4294901760
  %361 = vmatpush1.msra.mxu0 %v360
  %362 = vmatprep.subr.mxu0 0.0
  %363 = vmatpush1.msra.mxu0 0.0
  %364 = vmatprep.subr.mxu0 0.0
  %365 = vmatpush1.msra.mxu0 0.0
  %366 = vmatprep.subr.mxu0 0.0
  %367 = vmatpush1.msra.mxu0 0.0
  %368 = vmatprep.subr.mxu0 0.0
  %369 = vmatpush1.msra.mxu0 0.0
  %370 = vmatprep.subr.mxu0 0.0
  %371 = vmatpush1.msra.mxu0 0.0
  %372 = vmatprep.subr.mxu0 0.0
  %373 = vmatpush1.msra.mxu0 0.0
  %374 = vmatprep.subr.mxu0 0.0
  %375 = vmatpush1.msra.mxu0 0.0
  %376 = vmatprep.subr.mxu0 0.0
  %377 = vmatpush1.msra.mxu0 0.0
  %378 = vmatprep.subr.mxu0 0.0
  %379 = vmatpush1.msra.mxu0 0.0
  %380 = vmatprep.subr.mxu0 0.0
  %381 = vmatpush1.msra.mxu0 0.0
  %382 = vmatprep.subr.mxu0 0.0
  %383 = vmatpush1.msra.mxu0 0.0
  %384 = vmatprep.subr.mxu0 0.0
  %385 = vmatpush1.msra.mxu0 0.0
  %386 = vmatprep.subr.mxu0 0.0
  %387 = vmatpush1.msra.mxu0 0.0
  %388 = vmatprep.subr.mxu0 0.0
  %389 = vmatpush1.msra.mxu0 0.0
  %390 = vmatprep.subr.mxu0 0.0
  %391 = vmatpush1.msra.mxu0 0.0
  %392 = vmatprep.subr.mxu0 0.0
  %393 = vmatpush1.msra.mxu0 0.0
  %394 = vmatprep.subr.mxu0 0.0
  %395 = vmatpush1.msra.mxu0 0.0
  %396 = vmatprep.subr.mxu0 0.0
  %397 = vmatpush1.msra.mxu0 0.0
  %398 = vmatprep.subr.mxu0 0.0
  %399 = vmatpush1.msra.mxu0 0.0
  %400 = vmatprep.subr.mxu0 0.0
  %401 = vmatpush1.msra.mxu0 0.0
  %402 = vmatprep.subr.mxu0 0.0
  %403 = vmatpush1.msra.mxu0 0.0
  %404 = vmatprep.subr.mxu0 0.0
  %405 = vmatpush1.msra.mxu0 0.0
  %406 = vmatprep.subr.mxu0 0.0
  %407 = vmatpush1.msra.mxu0 0.0
  %408 = vmatprep.subr.mxu0 0.0
  %409 = vmatpush1.msra.mxu0 0.0
  %410 = vmatprep.subr.mxu0 0.0
  %411 = vmatpush1.msra.mxu0 0.0
  %412 = vmatprep.subr.mxu0 0.0
  %413 = vmatpush1.msra.mxu0 0.0
  %414 = vmatprep.mubr.f32.mxu0 0.0
  %v415 = vand.u32 %v38, 4294901760
  %416 = vmatmul.mubr.f32.gmra.mrb[0].mxu0 %v415
  %v417 = vpop.f32.mrb[0].mxu0
  %v418 = vadd.f32 %v167, %v417
  %v419 = vpop.f32.mrb[0].mxu0
  %420 = vmatprep.mubr.f32.mxu0 0.0
  %v421 = vand.u32 %v41, 4294901760
  %422 = vmatmul.mubr.f32.gmra.mrb[0].mxu0 %v421
  %v423 = vpop.f32.mrb[0].mxu0
  %v424 = vadd.f32 %v177, %v423
  %v425 = vpop.f32.mrb[0].mxu0
  %426 = vmatprep.mubr.f32.mxu0 0.0
  %v427 = vand.u32 %v44, 4294901760
  %428 = vmatmul.mubr.f32.gmra.mrb[0].mxu0 %v427
  %v429 = vpop.f32.mrb[0].mxu0
  %v430 = vadd.f32 %v187, %v429
  %v431 = vpop.f32.mrb[0].mxu0
  %432 = vmatprep.mubr.f32.mxu0 0.0
  %v433 = vand.u32 %v47, 4294901760
  %434 = vmatmul.mubr.f32.gmra.mrb[0].mxu0 %v433
  %v435 = vpop.f32.mrb[0].mxu0
  %v436 = vadd.f32 %v197, %v435
  %v437 = vpop.f32.mrb[0].mxu0
  %438 = vmatprep.mubr.f32.mxu0 0.0
  %v439 = vand.u32 %v50, 4294901760
  %440 = vmatmul.mubr.f32.gmra.mrb[0].mxu0 %v439
  %v441 = vpop.f32.mrb[0].mxu0
  %v442 = vadd.f32 %v207, %v441
  %v443 = vpop.f32.mrb[0].mxu0
  %444 = vmatprep.mubr.f32.mxu0 0.0
  %v445 = vand.u32 %v53, 4294901760
  %446 = vmatmul.mubr.f32.gmra.mrb[0].mxu0 %v445
  %v447 = vpop.f32.mrb[0].mxu0
  %v448 = vadd.f32 %v217, %v447
  %v449 = vpop.f32.mrb[0].mxu0
  %450 = vmatprep.mubr.f32.mxu0 0.0
  %v451 = vand.u32 %v56, 4294901760
  %452 = vmatmul.mubr.f32.gmra.mrb[0].mxu0 %v451
  %v453 = vpop.f32.mrb[0].mxu0
  %v454 = vadd.f32 %v227, %v453
  %v455 = vpop.f32.mrb[0].mxu0
  %456 = vmatprep.mubr.f32.mxu0 0.0
  %v457 = vand.u32 %v59, 4294901760
  %458 = vmatmul.mubr.f32.gmra.mrb[0].mxu0 %v457
  %v459 = vpop.f32.mrb[0].mxu0
  %v460 = vadd.f32 %v237, %v459
  %v461 = vpop.f32.mrb[0].mxu0
  %462 = vmatprep.mubr.f32.mxu0 0.0
  %v463 = vand.u32 %v62, 4294901760
  %464 = vmatmul.mubr.f32.gmra.mrb[0].mxu0 %v463
  %v465 = vpop.f32.mrb[0].mxu0
  %v466 = vadd.f32 %v247, %v465
  %v467 = vpop.f32.mrb[0].mxu0
  %468 = vmatprep.mubr.f32.mxu0 0.0
  %v469 = vand.u32 %v65, 4294901760
  %470 = vmatmul.mubr.f32.gmra.mrb[0].mxu0 %v469
  %v471 = vpop.f32.mrb[0].mxu0
  %v472 = vadd.f32 %v257, %v471
  %v473 = vpop.f32.mrb[0].mxu0
  %474 = vmatprep.mubr.f32.mxu0 0.0
  %v475 = vand.u32 %v68, 4294901760
  %476 = vmatmul.mubr.f32.gmra.mrb[0].mxu0 %v475
  %v477 = vpop.f32.mrb[0].mxu0
  %v478 = vadd.f32 %v267, %v477
  %v479 = vpop.f32.mrb[0].mxu0
  %480 = vmatprep.mubr.f32.mxu0 0.0
  %v481 = vand.u32 %v71, 4294901760
  %482 = vmatmul.mubr.f32.gmra.mrb[0].mxu0 %v481
  %v483 = vpop.f32.mrb[0].mxu0
  %v484 = vadd.f32 %v277, %v483
  %v485 = vpop.f32.mrb[0].mxu0
  %486 = vmatprep.mubr.f32.mxu0 0.0
  %v487 = vand.u32 %v74, 4294901760
  %488 = vmatmul.mubr.f32.gmra.mrb[0].mxu0 %v487
  %v489 = vpop.f32.mrb[0].mxu0
  %v490 = vadd.f32 %v287, %v489
  %v491 = vpop.f32.mrb[0].mxu0
  %492 = vmatprep.mubr.f32.mxu0 0.0
  %v493 = vand.u32 %v77, 4294901760
  %494 = vmatmul.mubr.f32.gmra.mrb[0].mxu0 %v493
  %v495 = vpop.f32.mrb[0].mxu0
  %v496 = vadd.f32 %v297, %v495
  %v497 = vpop.f32.mrb[0].mxu0
  %498 = vmatprep.mubr.f32.mxu0 0.0
  %v499 = vand.u32 %v80, 4294901760
  %500 = vmatmul.mubr.f32.gmra.mrb[0].mxu0 %v499
  %v501 = vpop.f32.mrb[0].mxu0
  %v502 = vadd.f32 %v307, %v501
  %v503 = vpop.f32.mrb[0].mxu0
  %504 = vmatprep.mubr.f32.mxu0 0.0
  %v505 = vand.u32 %v83, 4294901760
  %506 = vmatmul.mubr.f32.gmra.mrb[0].mxu0 %v505
  %v507 = vpop.f32.mrb[0].mxu0
  %v508 = vadd.f32 %v317, %v507
  %v509 = vpop.f32.mrb[0].mxu0
  %510 = vdwg.mxu0
  %511 = vmatprep.subr.mxu0 0.0
  %v512 = vand.u32 %v30, 4294901760
  %v513 = vsub.f32 %v30, %v512
  %514 = vmatpush1.msra.mxu0 %v513
  %515 = vmatprep.subr.mxu0 0.0
  %v516 = vand.u32 %v31, 4294901760
  %v517 = vsub.f32 %v31, %v516
  %518 = vmatpush1.msra.mxu0 %v517
  %519 = vmatprep.subr.mxu0 0.0
  %v520 = vand.u32 %v32, 4294901760
  %v521 = vsub.f32 %v32, %v520
  %522 = vmatpush1.msra.mxu0 %v521
  %523 = vmatprep.subr.mxu0 0.0
  %v524 = vand.u32 %v33, 4294901760
  %v525 = vsub.f32 %v33, %v524
  %526 = vmatpush1.msra.mxu0 %v525
  %527 = vmatprep.subr.mxu0 0.0
  %v528 = vand.u32 %v34, 4294901760
  %v529 = vsub.f32 %v34, %v528
  %530 = vmatpush1.msra.mxu0 %v529
  %531 = vmatprep.subr.mxu0 0.0
  %v532 = vand.u32 %v87, 4294901760
  %v533 = vsub.f32 %v87, %v532
  %534 = vmatpush1.msra.mxu0 %v533
  %535 = vmatprep.subr.mxu0 0.0
  %536 = vmatpush1.msra.mxu0 0.0
  %537 = vmatprep.subr.mxu0 0.0
  %538 = vmatpush1.msra.mxu0 0.0
  %539 = vmatprep.subr.mxu0 0.0
  %540 = vmatpush1.msra.mxu0 0.0
  %541 = vmatprep.subr.mxu0 0.0
  %542 = vmatpush1.msra.mxu0 0.0
  %543 = vmatprep.subr.mxu0 0.0
  %544 = vmatpush1.msra.mxu0 0.0
  %545 = vmatprep.subr.mxu0 0.0
  %546 = vmatpush1.msra.mxu0 0.0
  %547 = vmatprep.subr.mxu0 0.0
  %548 = vmatpush1.msra.mxu0 0.0
  %549 = vmatprep.subr.mxu0 0.0
  %550 = vmatpush1.msra.mxu0 0.0
  %551 = vmatprep.subr.mxu0 0.0
  %552 = vmatpush1.msra.mxu0 0.0
  %553 = vmatprep.subr.mxu0 0.0
  %554 = vmatpush1.msra.mxu0 0.0
  %555 = vmatprep.subr.mxu0 0.0
  %556 = vmatpush1.msra.mxu0 0.0
  %557 = vmatprep.subr.mxu0 0.0
  %558 = vmatpush1.msra.mxu0 0.0
  %559 = vmatprep.subr.mxu0 0.0
  %560 = vmatpush1.msra.mxu0 0.0
  %561 = vmatprep.subr.mxu0 0.0
  %562 = vmatpush1.msra.mxu0 0.0
  %563 = vmatprep.subr.mxu0 0.0
  %564 = vmatpush1.msra.mxu0 0.0
  %565 = vmatprep.subr.mxu0 0.0
  %566 = vmatpush1.msra.mxu0 0.0
  %567 = vmatprep.subr.mxu0 0.0
  %568 = vmatpush1.msra.mxu0 0.0
  %569 = vmatprep.subr.mxu0 0.0
  %570 = vmatpush1.msra.mxu0 0.0
  %571 = vmatprep.subr.mxu0 0.0
  %572 = vmatpush1.msra.mxu0 0.0
  %573 = vmatprep.subr.mxu0 0.0
  %574 = vmatpush1.msra.mxu0 0.0
  %575 = vmatprep.subr.mxu0 0.0
  %576 = vmatpush1.msra.mxu0 0.0
  %577 = vmatprep.subr.mxu0 0.0
  %578 = vmatpush1.msra.mxu0 0.0
  %579 = vmatprep.subr.mxu0 0.0
  %580 = vmatpush1.msra.mxu0 0.0
  %581 = vmatprep.subr.mxu0 0.0
  %582 = vmatpush1.msra.mxu0 0.0
  %583 = vmatprep.subr.mxu0 0.0
  %584 = vmatpush1.msra.mxu0 0.0
  %585 = vmatprep.subr.mxu0 0.0
  %586 = vmatpush1.msra.mxu0 0.0
  %587 = vmatprep.mubr.f32.mxu0 0.0
  %v588 = vand.u32 %v38, 4294901760
  %v589 = vsub.f32 %v38, %v588
  %590 = vmatmul.mubr.f32.gmra.mrb[0].mxu0 %v589
  %v591 = vpop.f32.mrb[0].mxu0
  %v592 = vadd.f32 %v418, %v591
  %v593 = vpop.f32.mrb[0].mxu0
  %594 = vmatprep.mubr.f32.mxu0 0.0
  %v595 = vand.u32 %v41, 4294901760
  %v596 = vsub.f32 %v41, %v595
  %597 = vmatmul.mubr.f32.gmra.mrb[0].mxu0 %v596
  %v598 = vpop.f32.mrb[0].mxu0
  %v599 = vadd.f32 %v424, %v598
  %v600 = vpop.f32.mrb[0].mxu0
  %601 = vmatprep.mubr.f32.mxu0 0.0
  %v602 = vand.u32 %v44, 4294901760
  %v603 = vsub.f32 %v44, %v602
  %604 = vmatmul.mubr.f32.gmra.mrb[0].mxu0 %v603
  %v605 = vpop.f32.mrb[0].mxu0
  %v606 = vadd.f32 %v430, %v605
  %v607 = vpop.f32.mrb[0].mxu0
  %608 = vmatprep.mubr.f32.mxu0 0.0
  %v609 = vand.u32 %v47, 4294901760
  %v610 = vsub.f32 %v47, %v609
  %611 = vmatmul.mubr.f32.gmra.mrb[0].mxu0 %v610
  %v612 = vpop.f32.mrb[0].mxu0
  %v613 = vadd.f32 %v436, %v612
  %v614 = vpop.f32.mrb[0].mxu0
  %615 = vmatprep.mubr.f32.mxu0 0.0
  %v616 = vand.u32 %v50, 4294901760
  %v617 = vsub.f32 %v50, %v616
  %618 = vmatmul.mubr.f32.gmra.mrb[0].mxu0 %v617
  %v619 = vpop.f32.mrb[0].mxu0
  %v620 = vadd.f32 %v442, %v619
  %v621 = vpop.f32.mrb[0].mxu0
  %622 = vmatprep.mubr.f32.mxu0 0.0
  %v623 = vand.u32 %v53, 4294901760
  %v624 = vsub.f32 %v53, %v623
  %625 = vmatmul.mubr.f32.gmra.mrb[0].mxu0 %v624
  %v626 = vpop.f32.mrb[0].mxu0
  %v627 = vadd.f32 %v448, %v626
  %v628 = vpop.f32.mrb[0].mxu0
  %629 = vmatprep.mubr.f32.mxu0 0.0
  %v630 = vand.u32 %v56, 4294901760
  %v631 = vsub.f32 %v56, %v630
  %632 = vmatmul.mubr.f32.gmra.mrb[0].mxu0 %v631
  %v633 = vpop.f32.mrb[0].mxu0
  %v634 = vadd.f32 %v454, %v633
  %v635 = vpop.f32.mrb[0].mxu0
  %636 = vmatprep.mubr.f32.mxu0 0.0
  %v637 = vand.u32 %v59, 4294901760
  %v638 = vsub.f32 %v59, %v637
  %639 = vmatmul.mubr.f32.gmra.mrb[0].mxu0 %v638
  %v640 = vpop.f32.mrb[0].mxu0
  %v641 = vadd.f32 %v460, %v640
  %v642 = vpop.f32.mrb[0].mxu0
  %643 = vmatprep.mubr.f32.mxu0 0.0
  %v644 = vand.u32 %v62, 4294901760
  %v645 = vsub.f32 %v62, %v644
  %646 = vmatmul.mubr.f32.gmra.mrb[0].mxu0 %v645
  %v647 = vpop.f32.mrb[0].mxu0
  %v648 = vadd.f32 %v466, %v647
  %v649 = vpop.f32.mrb[0].mxu0
  %650 = vmatprep.mubr.f32.mxu0 0.0
  %v651 = vand.u32 %v65, 4294901760
  %v652 = vsub.f32 %v65, %v651
  %653 = vmatmul.mubr.f32.gmra.mrb[0].mxu0 %v652
  %v654 = vpop.f32.mrb[0].mxu0
  %v655 = vadd.f32 %v472, %v654
  %v656 = vpop.f32.mrb[0].mxu0
  %657 = vmatprep.mubr.f32.mxu0 0.0
  %v658 = vand.u32 %v68, 4294901760
  %v659 = vsub.f32 %v68, %v658
  %660 = vmatmul.mubr.f32.gmra.mrb[0].mxu0 %v659
  %v661 = vpop.f32.mrb[0].mxu0
  %v662 = vadd.f32 %v478, %v661
  %v663 = vpop.f32.mrb[0].mxu0
  %664 = vmatprep.mubr.f32.mxu0 0.0
  %v665 = vand.u32 %v71, 4294901760
  %v666 = vsub.f32 %v71, %v665
  %667 = vmatmul.mubr.f32.gmra.mrb[0].mxu0 %v666
  %v668 = vpop.f32.mrb[0].mxu0
  %v669 = vadd.f32 %v484, %v668
  %v670 = vpop.f32.mrb[0].mxu0
  %671 = vmatprep.mubr.f32.mxu0 0.0
  %v672 = vand.u32 %v74, 4294901760
  %v673 = vsub.f32 %v74, %v672
  %674 = vmatmul.mubr.f32.gmra.mrb[0].mxu0 %v673
  %v675 = vpop.f32.mrb[0].mxu0
  %v676 = vadd.f32 %v490, %v675
  %v677 = vpop.f32.mrb[0].mxu0
  %678 = vmatprep.mubr.f32.mxu0 0.0
  %v679 = vand.u32 %v77, 4294901760
  %v680 = vsub.f32 %v77, %v679
  %681 = vmatmul.mubr.f32.gmra.mrb[0].mxu0 %v680
  %v682 = vpop.f32.mrb[0].mxu0
  %v683 = vadd.f32 %v496, %v682
  %v684 = vpop.f32.mrb[0].mxu0
  %685 = vmatprep.mubr.f32.mxu0 0.0
  %v686 = vand.u32 %v80, 4294901760
  %v687 = vsub.f32 %v80, %v686
  %688 = vmatmul.mubr.f32.gmra.mrb[0].mxu0 %v687
  %v689 = vpop.f32.mrb[0].mxu0
  %v690 = vadd.f32 %v502, %v689
  %v691 = vpop.f32.mrb[0].mxu0
  %692 = vmatprep.mubr.f32.mxu0 0.0
  %v693 = vand.u32 %v83, 4294901760
  %v694 = vsub.f32 %v83, %v693
  %695 = vmatmul.mubr.f32.gmra.mrb[0].mxu0 %v694
  %v696 = vpop.f32.mrb[0].mxu0
  %v697 = vadd.f32 %v508, %v696
  %v698 = vpop.f32.mrb[0].mxu0
  %699 = vdwg.mxu0
  %700 = vmatprep.subr.mxu0 0.0
  %v701 = vand.u32 %v30, 4294901760
  %702 = vmatpush1.msra.mxu0 %v701
  %703 = vmatprep.subr.mxu0 0.0
  %v704 = vand.u32 %v31, 4294901760
  %705 = vmatpush1.msra.mxu0 %v704
  %706 = vmatprep.subr.mxu0 0.0
  %v707 = vand.u32 %v32, 4294901760
  %708 = vmatpush1.msra.mxu0 %v707
  %709 = vmatprep.subr.mxu0 0.0
  %v710 = vand.u32 %v33, 4294901760
  %711 = vmatpush1.msra.mxu0 %v710
  %712 = vmatprep.subr.mxu0 0.0
  %v713 = vand.u32 %v34, 4294901760
  %714 = vmatpush1.msra.mxu0 %v713
  %715 = vmatprep.subr.mxu0 0.0
  %v716 = vand.u32 %v87, 4294901760
  %717 = vmatpush1.msra.mxu0 %v716
  %718 = vmatprep.subr.mxu0 0.0
  %719 = vmatpush1.msra.mxu0 0.0
  %720 = vmatprep.subr.mxu0 0.0
  %721 = vmatpush1.msra.mxu0 0.0
  %722 = vmatprep.subr.mxu0 0.0
  %723 = vmatpush1.msra.mxu0 0.0
  %724 = vmatprep.subr.mxu0 0.0
  %725 = vmatpush1.msra.mxu0 0.0
  %726 = vmatprep.subr.mxu0 0.0
  %727 = vmatpush1.msra.mxu0 0.0
  %728 = vmatprep.subr.mxu0 0.0
  %729 = vmatpush1.msra.mxu0 0.0
  %730 = vmatprep.subr.mxu0 0.0
  %731 = vmatpush1.msra.mxu0 0.0
  %732 = vmatprep.subr.mxu0 0.0
  %733 = vmatpush1.msra.mxu0 0.0
  %734 = vmatprep.subr.mxu0 0.0
  %735 = vmatpush1.msra.mxu0 0.0
  %736 = vmatprep.subr.mxu0 0.0
  %737 = vmatpush1.msra.mxu0 0.0
  %738 = vmatprep.subr.mxu0 0.0
  %739 = vmatpush1.msra.mxu0 0.0
  %740 = vmatprep.subr.mxu0 0.0
  %741 = vmatpush1.msra.mxu0 0.0
  %742 = vmatprep.subr.mxu0 0.0
  %743 = vmatpush1.msra.mxu0 0.0
  %744 = vmatprep.subr.mxu0 0.0
  %745 = vmatpush1.msra.mxu0 0.0
  %746 = vmatprep.subr.mxu0 0.0
  %747 = vmatpush1.msra.mxu0 0.0
  %748 = vmatprep.subr.mxu0 0.0
  %749 = vmatpush1.msra.mxu0 0.0
  %750 = vmatprep.subr.mxu0 0.0
  %751 = vmatpush1.msra.mxu0 0.0
  %752 = vmatprep.subr.mxu0 0.0
  %753 = vmatpush1.msra.mxu0 0.0
  %754 = vmatprep.subr.mxu0 0.0
  %755 = vmatpush1.msra.mxu0 0.0
  %756 = vmatprep.subr.mxu0 0.0
  %757 = vmatpush1.msra.mxu0 0.0
  %758 = vmatprep.subr.mxu0 0.0
  %759 = vmatpush1.msra.mxu0 0.0
  %760 = vmatprep.subr.mxu0 0.0
  %761 = vmatpush1.msra.mxu0 0.0
  %762 = vmatprep.subr.mxu0 0.0
  %763 = vmatpush1.msra.mxu0 0.0
  %764 = vmatprep.subr.mxu0 0.0
  %765 = vmatpush1.msra.mxu0 0.0
  %766 = vmatprep.subr.mxu0 0.0
  %767 = vmatpush1.msra.mxu0 0.0
  %768 = vmatprep.subr.mxu0 0.0
  %769 = vmatpush1.msra.mxu0 0.0
  %770 = vmatprep.mubr.f32.mxu0 0.0
  %v771 = vand.u32 %v38, 4294901760
  %v772 = vsub.f32 %v38, %v771
  %v773 = vand.u32 %v772, 4294901760
  %774 = vmatmul.mubr.f32.gmra.mrb[0].mxu0 %v773
  %v775 = vpop.f32.mrb[0].mxu0
  %v776 = vadd.f32 %v592, %v775
  %v777 = vpop.f32.mrb[0].mxu0
  %778 = vmatprep.mubr.f32.mxu0 0.0
  %v779 = vand.u32 %v41, 4294901760
  %v780 = vsub.f32 %v41, %v779
  %v781 = vand.u32 %v780, 4294901760
  %782 = vmatmul.mubr.f32.gmra.mrb[0].mxu0 %v781
  %v783 = vpop.f32.mrb[0].mxu0
  %v784 = vadd.f32 %v599, %v783
  %v785 = vpop.f32.mrb[0].mxu0
  %786 = vmatprep.mubr.f32.mxu0 0.0
  %v787 = vand.u32 %v44, 4294901760
  %v788 = vsub.f32 %v44, %v787
  %v789 = vand.u32 %v788, 4294901760
  %790 = vmatmul.mubr.f32.gmra.mrb[0].mxu0 %v789
  %v791 = vpop.f32.mrb[0].mxu0
  %v792 = vadd.f32 %v606, %v791
  %v793 = vpop.f32.mrb[0].mxu0
  %794 = vmatprep.mubr.f32.mxu0 0.0
  %v795 = vand.u32 %v47, 4294901760
  %v796 = vsub.f32 %v47, %v795
  %v797 = vand.u32 %v796, 4294901760
  %798 = vmatmul.mubr.f32.gmra.mrb[0].mxu0 %v797
  %v799 = vpop.f32.mrb[0].mxu0
  %v800 = vadd.f32 %v613, %v799
  %v801 = vpop.f32.mrb[0].mxu0
  %802 = vmatprep.mubr.f32.mxu0 0.0
  %v803 = vand.u32 %v50, 4294901760
  %v804 = vsub.f32 %v50, %v803
  %v805 = vand.u32 %v804, 4294901760
  %806 = vmatmul.mubr.f32.gmra.mrb[0].mxu0 %v805
  %v807 = vpop.f32.mrb[0].mxu0
  %v808 = vadd.f32 %v620, %v807
  %v809 = vpop.f32.mrb[0].mxu0
  %810 = vmatprep.mubr.f32.mxu0 0.0
  %v811 = vand.u32 %v53, 4294901760
  %v812 = vsub.f32 %v53, %v811
  %v813 = vand.u32 %v812, 4294901760
  %814 = vmatmul.mubr.f32.gmra.mrb[0].mxu0 %v813
  %v815 = vpop.f32.mrb[0].mxu0
  %v816 = vadd.f32 %v627, %v815
  %v817 = vpop.f32.mrb[0].mxu0
  %818 = vmatprep.mubr.f32.mxu0 0.0
  %v819 = vand.u32 %v56, 4294901760
  %v820 = vsub.f32 %v56, %v819
  %v821 = vand.u32 %v820, 4294901760
  %822 = vmatmul.mubr.f32.gmra.mrb[0].mxu0 %v821
  %v823 = vpop.f32.mrb[0].mxu0
  %v824 = vadd.f32 %v634, %v823
  %v825 = vpop.f32.mrb[0].mxu0
  %826 = vmatprep.mubr.f32.mxu0 0.0
  %v827 = vand.u32 %v59, 4294901760
  %v828 = vsub.f32 %v59, %v827
  %v829 = vand.u32 %v828, 4294901760
  %830 = vmatmul.mubr.f32.gmra.mrb[0].mxu0 %v829
  %v831 = vpop.f32.mrb[0].mxu0
  %v832 = vadd.f32 %v641, %v831
  %v833 = vpop.f32.mrb[0].mxu0
  %834 = vmatprep.mubr.f32.mxu0 0.0
  %v835 = vand.u32 %v62, 4294901760
  %v836 = vsub.f32 %v62, %v835
  %v837 = vand.u32 %v836, 4294901760
  %838 = vmatmul.mubr.f32.gmra.mrb[0].mxu0 %v837
  %v839 = vpop.f32.mrb[0].mxu0
  %v840 = vadd.f32 %v648, %v839
  %v841 = vpop.f32.mrb[0].mxu0
  %842 = vmatprep.mubr.f32.mxu0 0.0
  %v843 = vand.u32 %v65, 4294901760
  %v844 = vsub.f32 %v65, %v843
  %v845 = vand.u32 %v844, 4294901760
  %846 = vmatmul.mubr.f32.gmra.mrb[0].mxu0 %v845
  %v847 = vpop.f32.mrb[0].mxu0
  %v848 = vadd.f32 %v655, %v847
  %v849 = vpop.f32.mrb[0].mxu0
  %850 = vmatprep.mubr.f32.mxu0 0.0
  %v851 = vand.u32 %v68, 4294901760
  %v852 = vsub.f32 %v68, %v851
  %v853 = vand.u32 %v852, 4294901760
  %854 = vmatmul.mubr.f32.gmra.mrb[0].mxu0 %v853
  %v855 = vpop.f32.mrb[0].mxu0
  %v856 = vadd.f32 %v662, %v855
  %v857 = vpop.f32.mrb[0].mxu0
  %858 = vmatprep.mubr.f32.mxu0 0.0
  %v859 = vand.u32 %v71, 4294901760
  %v860 = vsub.f32 %v71, %v859
  %v861 = vand.u32 %v860, 4294901760
  %862 = vmatmul.mubr.f32.gmra.mrb[0].mxu0 %v861
  %v863 = vpop.f32.mrb[0].mxu0
  %v864 = vadd.f32 %v669, %v863
  %v865 = vpop.f32.mrb[0].mxu0
  %866 = vmatprep.mubr.f32.mxu0 0.0
  %v867 = vand.u32 %v74, 4294901760
  %v868 = vsub.f32 %v74, %v867
  %v869 = vand.u32 %v868, 4294901760
  %870 = vmatmul.mubr.f32.gmra.mrb[0].mxu0 %v869
  %v871 = vpop.f32.mrb[0].mxu0
  %v872 = vadd.f32 %v676, %v871
  %v873 = vpop.f32.mrb[0].mxu0
  %874 = vmatprep.mubr.f32.mxu0 0.0
  %v875 = vand.u32 %v77, 4294901760
  %v876 = vsub.f32 %v77, %v875
  %v877 = vand.u32 %v876, 4294901760
  %878 = vmatmul.mubr.f32.gmra.mrb[0].mxu0 %v877
  %v879 = vpop.f32.mrb[0].mxu0
  %v880 = vadd.f32 %v683, %v879
  %v881 = vpop.f32.mrb[0].mxu0
  %882 = vmatprep.mubr.f32.mxu0 0.0
  %v883 = vand.u32 %v80, 4294901760
  %v884 = vsub.f32 %v80, %v883
  %v885 = vand.u32 %v884, 4294901760
  %886 = vmatmul.mubr.f32.gmra.mrb[0].mxu0 %v885
  %v887 = vpop.f32.mrb[0].mxu0
  %v888 = vadd.f32 %v690, %v887
  %v889 = vpop.f32.mrb[0].mxu0
  %890 = vmatprep.mubr.f32.mxu0 0.0
  %v891 = vand.u32 %v83, 4294901760
  %v892 = vsub.f32 %v83, %v891
  %v893 = vand.u32 %v892, 4294901760
  %894 = vmatmul.mubr.f32.gmra.mrb[0].mxu0 %v893
  %v895 = vpop.f32.mrb[0].mxu0
  %v896 = vadd.f32 %v697, %v895
  %v897 = vpop.f32.mrb[0].mxu0
  %898 = vdwg.mxu0
  %899 = vmatprep.subr.mxu0 0.0
  %v900 = vand.u32 %v30, 4294901760
  %v901 = vsub.f32 %v30, %v900
  %v902 = vand.u32 %v901, 4294901760
  %903 = vmatpush1.msra.mxu0 %v902
  %904 = vmatprep.subr.mxu0 0.0
  %v905 = vand.u32 %v31, 4294901760
  %v906 = vsub.f32 %v31, %v905
  %v907 = vand.u32 %v906, 4294901760
  %908 = vmatpush1.msra.mxu0 %v907
  %909 = vmatprep.subr.mxu0 0.0
  %v910 = vand.u32 %v32, 4294901760
  %v911 = vsub.f32 %v32, %v910
  %v912 = vand.u32 %v911, 4294901760
  %913 = vmatpush1.msra.mxu0 %v912
  %914 = vmatprep.subr.mxu0 0.0
  %v915 = vand.u32 %v33, 4294901760
  %v916 = vsub.f32 %v33, %v915
  %v917 = vand.u32 %v916, 4294901760
  %918 = vmatpush1.msra.mxu0 %v917
  %919 = vmatprep.subr.mxu0 0.0
  %v920 = vand.u32 %v34, 4294901760
  %v921 = vsub.f32 %v34, %v920
  %v922 = vand.u32 %v921, 4294901760
  %923 = vmatpush1.msra.mxu0 %v922
  %924 = vmatprep.subr.mxu0 0.0
  %v925 = vand.u32 %v87, 4294901760
  %v926 = vsub.f32 %v87, %v925
  %v927 = vand.u32 %v926, 4294901760
  %928 = vmatpush1.msra.mxu0 %v927
  %929 = vmatprep.subr.mxu0 0.0
  %930 = vmatpush1.msra.mxu0 0.0
  %931 = vmatprep.subr.mxu0 0.0
  %932 = vmatpush1.msra.mxu0 0.0
  %933 = vmatprep.subr.mxu0 0.0
  %934 = vmatpush1.msra.mxu0 0.0
  %935 = vmatprep.subr.mxu0 0.0
  %936 = vmatpush1.msra.mxu0 0.0
  %937 = vmatprep.subr.mxu0 0.0
  %938 = vmatpush1.msra.mxu0 0.0
  %939 = vmatprep.subr.mxu0 0.0
  %940 = vmatpush1.msra.mxu0 0.0
  %941 = vmatprep.subr.mxu0 0.0
  %942 = vmatpush1.msra.mxu0 0.0
  %943 = vmatprep.subr.mxu0 0.0
  %944 = vmatpush1.msra.mxu0 0.0
  %945 = vmatprep.subr.mxu0 0.0
  %946 = vmatpush1.msra.mxu0 0.0
  %947 = vmatprep.subr.mxu0 0.0
  %948 = vmatpush1.msra.mxu0 0.0
  %949 = vmatprep.subr.mxu0 0.0
  %950 = vmatpush1.msra.mxu0 0.0
  %951 = vmatprep.subr.mxu0 0.0
  %952 = vmatpush1.msra.mxu0 0.0
  %953 = vmatprep.subr.mxu0 0.0
  %954 = vmatpush1.msra.mxu0 0.0
  %955 = vmatprep.subr.mxu0 0.0
  %956 = vmatpush1.msra.mxu0 0.0
  %957 = vmatprep.subr.mxu0 0.0
  %958 = vmatpush1.msra.mxu0 0.0
  %959 = vmatprep.subr.mxu0 0.0
  %960 = vmatpush1.msra.mxu0 0.0
  %961 = vmatprep.subr.mxu0 0.0
  %962 = vmatpush1.msra.mxu0 0.0
  %963 = vmatprep.subr.mxu0 0.0
  %964 = vmatpush1.msra.mxu0 0.0
  %965 = vmatprep.subr.mxu0 0.0
  %966 = vmatpush1.msra.mxu0 0.0
  %967 = vmatprep.subr.mxu0 0.0
  %968 = vmatpush1.msra.mxu0 0.0
  %969 = vmatprep.subr.mxu0 0.0
  %970 = vmatpush1.msra.mxu0 0.0
  %971 = vmatprep.subr.mxu0 0.0
  %972 = vmatpush1.msra.mxu0 0.0
  %973 = vmatprep.subr.mxu0 0.0
  %974 = vmatpush1.msra.mxu0 0.0
  %975 = vmatprep.subr.mxu0 0.0
  %976 = vmatpush1.msra.mxu0 0.0
  %977 = vmatprep.subr.mxu0 0.0
  %978 = vmatpush1.msra.mxu0 0.0
  %979 = vmatprep.subr.mxu0 0.0
  %980 = vmatpush1.msra.mxu0 0.0
  %981 = vmatprep.mubr.f32.mxu0 0.0
  %v982 = vand.u32 %v38, 4294901760
  %983 = vmatmul.mubr.f32.gmra.mrb[0].mxu0 %v982
  %v984 = vpop.f32.mrb[0].mxu0
  %v985 = vadd.f32 %v776, %v984
  %v986 = vpop.f32.mrb[0].mxu0
  %987 = vmatprep.mubr.f32.mxu0 0.0
  %v988 = vand.u32 %v41, 4294901760
  %989 = vmatmul.mubr.f32.gmra.mrb[0].mxu0 %v988
  %v990 = vpop.f32.mrb[0].mxu0
  %v991 = vadd.f32 %v784, %v990
  %v992 = vpop.f32.mrb[0].mxu0
  %993 = vmatprep.mubr.f32.mxu0 0.0
  %v994 = vand.u32 %v44, 4294901760
  %995 = vmatmul.mubr.f32.gmra.mrb[0].mxu0 %v994
  %v996 = vpop.f32.mrb[0].mxu0
  %v997 = vadd.f32 %v792, %v996
  %v998 = vpop.f32.mrb[0].mxu0
  %999 = vmatprep.mubr.f32.mxu0 0.0
  %v1000 = vand.u32 %v47, 4294901760
  %1001 = vmatmul.mubr.f32.gmra.mrb[0].mxu0 %v1000
  %v1002 = vpop.f32.mrb[0].mxu0
  %v1003 = vadd.f32 %v800, %v1002
  %v1004 = vpop.f32.mrb[0].mxu0
  %1005 = vmatprep.mubr.f32.mxu0 0.0
  %v1006 = vand.u32 %v50, 4294901760
  %1007 = vmatmul.mubr.f32.gmra.mrb[0].mxu0 %v1006
  %v1008 = vpop.f32.mrb[0].mxu0
  %v1009 = vadd.f32 %v808, %v1008
  %v1010 = vpop.f32.mrb[0].mxu0
  %1011 = vmatprep.mubr.f32.mxu0 0.0
  %v1012 = vand.u32 %v53, 4294901760
  %1013 = vmatmul.mubr.f32.gmra.mrb[0].mxu0 %v1012
  %v1014 = vpop.f32.mrb[0].mxu0
  %v1015 = vadd.f32 %v816, %v1014
  %v1016 = vpop.f32.mrb[0].mxu0
  %1017 = vmatprep.mubr.f32.mxu0 0.0
  %v1018 = vand.u32 %v56, 4294901760
  %1019 = vmatmul.mubr.f32.gmra.mrb[0].mxu0 %v1018
  %v1020 = vpop.f32.mrb[0].mxu0
  %v1021 = vadd.f32 %v824, %v1020
  %v1022 = vpop.f32.mrb[0].mxu0
  %1023 = vmatprep.mubr.f32.mxu0 0.0
  %v1024 = vand.u32 %v59, 4294901760
  %1025 = vmatmul.mubr.f32.gmra.mrb[0].mxu0 %v1024
  %v1026 = vpop.f32.mrb[0].mxu0
  %v1027 = vadd.f32 %v832, %v1026
  %v1028 = vpop.f32.mrb[0].mxu0
  %1029 = vmatprep.mubr.f32.mxu0 0.0
  %v1030 = vand.u32 %v62, 4294901760
  %1031 = vmatmul.mubr.f32.gmra.mrb[0].mxu0 %v1030
  %v1032 = vpop.f32.mrb[0].mxu0
  %v1033 = vadd.f32 %v840, %v1032
  %v1034 = vpop.f32.mrb[0].mxu0
  %1035 = vmatprep.mubr.f32.mxu0 0.0
  %v1036 = vand.u32 %v65, 4294901760
  %1037 = vmatmul.mubr.f32.gmra.mrb[0].mxu0 %v1036
  %v1038 = vpop.f32.mrb[0].mxu0
  %v1039 = vadd.f32 %v848, %v1038
  %v1040 = vpop.f32.mrb[0].mxu0
  %1041 = vmatprep.mubr.f32.mxu0 0.0
  %v1042 = vand.u32 %v68, 4294901760
  %1043 = vmatmul.mubr.f32.gmra.mrb[0].mxu0 %v1042
  %v1044 = vpop.f32.mrb[0].mxu0
  %v1045 = vadd.f32 %v856, %v1044
  %v1046 = vpop.f32.mrb[0].mxu0
  %1047 = vmatprep.mubr.f32.mxu0 0.0
  %v1048 = vand.u32 %v71, 4294901760
  %1049 = vmatmul.mubr.f32.gmra.mrb[0].mxu0 %v1048
  %v1050 = vpop.f32.mrb[0].mxu0
  %v1051 = vadd.f32 %v864, %v1050
  %v1052 = vpop.f32.mrb[0].mxu0
  %1053 = vmatprep.mubr.f32.mxu0 0.0
  %v1054 = vand.u32 %v74, 4294901760
  %1055 = vmatmul.mubr.f32.gmra.mrb[0].mxu0 %v1054
  %v1056 = vpop.f32.mrb[0].mxu0
  %v1057 = vadd.f32 %v872, %v1056
  %v1058 = vpop.f32.mrb[0].mxu0
  %1059 = vmatprep.mubr.f32.mxu0 0.0
  %v1060 = vand.u32 %v77, 4294901760
  %1061 = vmatmul.mubr.f32.gmra.mrb[0].mxu0 %v1060
  %v1062 = vpop.f32.mrb[0].mxu0
  %v1063 = vadd.f32 %v880, %v1062
  %v1064 = vpop.f32.mrb[0].mxu0
  %1065 = vmatprep.mubr.f32.mxu0 0.0
  %v1066 = vand.u32 %v80, 4294901760
  %1067 = vmatmul.mubr.f32.gmra.mrb[0].mxu0 %v1066
  %v1068 = vpop.f32.mrb[0].mxu0
  %v1069 = vadd.f32 %v888, %v1068
  %v1070 = vpop.f32.mrb[0].mxu0
  %1071 = vmatprep.mubr.f32.mxu0 0.0
  %v1072 = vand.u32 %v83, 4294901760
  %1073 = vmatmul.mubr.f32.gmra.mrb[0].mxu0 %v1072
  %v1074 = vpop.f32.mrb[0].mxu0
  %v1075 = vadd.f32 %v896, %v1074
  %v1076 = vpop.f32.mrb[0].mxu0
  %1077 = vdwg.mxu0
  %1078 = vmatprep.subr.mxu0 0.0
  %v1079 = vand.u32 %v30, 4294901760
  %1080 = vmatpush1.msra.mxu0 %v1079
  %1081 = vmatprep.subr.mxu0 0.0
  %v1082 = vand.u32 %v31, 4294901760
  %1083 = vmatpush1.msra.mxu0 %v1082
  %1084 = vmatprep.subr.mxu0 0.0
  %v1085 = vand.u32 %v32, 4294901760
  %1086 = vmatpush1.msra.mxu0 %v1085
  %1087 = vmatprep.subr.mxu0 0.0
  %v1088 = vand.u32 %v33, 4294901760
  %1089 = vmatpush1.msra.mxu0 %v1088
  %1090 = vmatprep.subr.mxu0 0.0
  %v1091 = vand.u32 %v34, 4294901760
  %1092 = vmatpush1.msra.mxu0 %v1091
  %1093 = vmatprep.subr.mxu0 0.0
  %v1094 = vand.u32 %v87, 4294901760
  %1095 = vmatpush1.msra.mxu0 %v1094
  %1096 = vmatprep.subr.mxu0 0.0
  %1097 = vmatpush1.msra.mxu0 0.0
  %1098 = vmatprep.subr.mxu0 0.0
  %1099 = vmatpush1.msra.mxu0 0.0
  %1100 = vmatprep.subr.mxu0 0.0
  %1101 = vmatpush1.msra.mxu0 0.0
  %1102 = vmatprep.subr.mxu0 0.0
  %1103 = vmatpush1.msra.mxu0 0.0
  %1104 = vmatprep.subr.mxu0 0.0
  %1105 = vmatpush1.msra.mxu0 0.0
  %1106 = vmatprep.subr.mxu0 0.0
  %1107 = vmatpush1.msra.mxu0 0.0
  %1108 = vmatprep.subr.mxu0 0.0
  %1109 = vmatpush1.msra.mxu0 0.0
  %1110 = vmatprep.subr.mxu0 0.0
  %1111 = vmatpush1.msra.mxu0 0.0
  %1112 = vmatprep.subr.mxu0 0.0
  %1113 = vmatpush1.msra.mxu0 0.0
  %1114 = vmatprep.subr.mxu0 0.0
  %1115 = vmatpush1.msra.mxu0 0.0
  %1116 = vmatprep.subr.mxu0 0.0
  %1117 = vmatpush1.msra.mxu0 0.0
  %1118 = vmatprep.subr.mxu0 0.0
  %1119 = vmatpush1.msra.mxu0 0.0
  %1120 = vmatprep.subr.mxu0 0.0
  %1121 = vmatpush1.msra.mxu0 0.0
  %1122 = vmatprep.subr.mxu0 0.0
  %1123 = vmatpush1.msra.mxu0 0.0
  %1124 = vmatprep.subr.mxu0 0.0
  %1125 = vmatpush1.msra.mxu0 0.0
  %1126 = vmatprep.subr.mxu0 0.0
  %1127 = vmatpush1.msra.mxu0 0.0
  %1128 = vmatprep.subr.mxu0 0.0
  %1129 = vmatpush1.msra.mxu0 0.0
  %1130 = vmatprep.subr.mxu0 0.0
  %1131 = vmatpush1.msra.mxu0 0.0
  %1132 = vmatprep.subr.mxu0 0.0
  %1133 = vmatpush1.msra.mxu0 0.0
  %1134 = vmatprep.subr.mxu0 0.0
  %1135 = vmatpush1.msra.mxu0 0.0
  %1136 = vmatprep.subr.mxu0 0.0
  %1137 = vmatpush1.msra.mxu0 0.0
  %1138 = vmatprep.subr.mxu0 0.0
  %1139 = vmatpush1.msra.mxu0 0.0
  %1140 = vmatprep.subr.mxu0 0.0
  %1141 = vmatpush1.msra.mxu0 0.0
  %1142 = vmatprep.subr.mxu0 0.0
  %1143 = vmatpush1.msra.mxu0 0.0
  %1144 = vmatprep.subr.mxu0 0.0
  %1145 = vmatpush1.msra.mxu0 0.0
  %1146 = vmatprep.subr.mxu0 0.0
  %1147 = vmatpush1.msra.mxu0 0.0
  %1148 = vmatprep.mubr.f32.mxu0 0.0
  %v1149 = vand.u32 %v38, 4294901760
  %1150 = vmatmul.mubr.f32.gmra.mrb[0].mxu0 %v1149
  %v1151 = vpop.f32.mrb[0].mxu0
  %v1152 = vadd.f32 %v985, %v1151
  %v1153 = vpop.f32.mrb[0].mxu0
  %1154 = vmatprep.mubr.f32.mxu0 0.0
  %v1155 = vand.u32 %v41, 4294901760
  %1156 = vmatmul.mubr.f32.gmra.mrb[0].mxu0 %v1155
  %v1157 = vpop.f32.mrb[0].mxu0
  %v1158 = vadd.f32 %v991, %v1157
  %v1159 = vpop.f32.mrb[0].mxu0
  %1160 = vmatprep.mubr.f32.mxu0 0.0
  %v1161 = vand.u32 %v44, 4294901760
  %1162 = vmatmul.mubr.f32.gmra.mrb[0].mxu0 %v1161
  %v1163 = vpop.f32.mrb[0].mxu0
  %v1164 = vadd.f32 %v997, %v1163
  %v1165 = vpop.f32.mrb[0].mxu0
  %1166 = vmatprep.mubr.f32.mxu0 0.0
  %v1167 = vand.u32 %v47, 4294901760
  %1168 = vmatmul.mubr.f32.gmra.mrb[0].mxu0 %v1167
  %v1169 = vpop.f32.mrb[0].mxu0
  %v1170 = vadd.f32 %v1003, %v1169
  %v1171 = vpop.f32.mrb[0].mxu0
  %1172 = vmatprep.mubr.f32.mxu0 0.0
  %v1173 = vand.u32 %v50, 4294901760
  %1174 = vmatmul.mubr.f32.gmra.mrb[0].mxu0 %v1173
  %v1175 = vpop.f32.mrb[0].mxu0
  %v1176 = vadd.f32 %v1009, %v1175
  %v1177 = vpop.f32.mrb[0].mxu0
  %1178 = vmatprep.mubr.f32.mxu0 0.0
  %v1179 = vand.u32 %v53, 4294901760
  %1180 = vmatmul.mubr.f32.gmra.mrb[0].mxu0 %v1179
  %v1181 = vpop.f32.mrb[0].mxu0
  %v1182 = vadd.f32 %v1015, %v1181
  %v1183 = vpop.f32.mrb[0].mxu0
  %1184 = vmatprep.mubr.f32.mxu0 0.0
  %v1185 = vand.u32 %v56, 4294901760
  %1186 = vmatmul.mubr.f32.gmra.mrb[0].mxu0 %v1185
  %v1187 = vpop.f32.mrb[0].mxu0
  %v1188 = vadd.f32 %v1021, %v1187
  %v1189 = vpop.f32.mrb[0].mxu0
  %1190 = vmatprep.mubr.f32.mxu0 0.0
  %v1191 = vand.u32 %v59, 4294901760
  %1192 = vmatmul.mubr.f32.gmra.mrb[0].mxu0 %v1191
  %v1193 = vpop.f32.mrb[0].mxu0
  %v1194 = vadd.f32 %v1027, %v1193
  %v1195 = vpop.f32.mrb[0].mxu0
  %1196 = vmatprep.mubr.f32.mxu0 0.0
  %v1197 = vand.u32 %v62, 4294901760
  %1198 = vmatmul.mubr.f32.gmra.mrb[0].mxu0 %v1197
  %v1199 = vpop.f32.mrb[0].mxu0
  %v1200 = vadd.f32 %v1033, %v1199
  %v1201 = vpop.f32.mrb[0].mxu0
  %1202 = vmatprep.mubr.f32.mxu0 0.0
  %v1203 = vand.u32 %v65, 4294901760
  %1204 = vmatmul.mubr.f32.gmra.mrb[0].mxu0 %v1203
  %v1205 = vpop.f32.mrb[0].mxu0
  %v1206 = vadd.f32 %v1039, %v1205
  %v1207 = vpop.f32.mrb[0].mxu0
  %1208 = vmatprep.mubr.f32.mxu0 0.0
  %v1209 = vand.u32 %v68, 4294901760
  %1210 = vmatmul.mubr.f32.gmra.mrb[0].mxu0 %v1209
  %v1211 = vpop.f32.mrb[0].mxu0
  %v1212 = vadd.f32 %v1045, %v1211
  %v1213 = vpop.f32.mrb[0].mxu0
  %1214 = vmatprep.mubr.f32.mxu0 0.0
  %v1215 = vand.u32 %v71, 4294901760
  %1216 = vmatmul.mubr.f32.gmra.mrb[0].mxu0 %v1215
  %v1217 = vpop.f32.mrb[0].mxu0
  %v1218 = vadd.f32 %v1051, %v1217
  %v1219 = vpop.f32.mrb[0].mxu0
  %1220 = vmatprep.mubr.f32.mxu0 0.0
  %v1221 = vand.u32 %v74, 4294901760
  %1222 = vmatmul.mubr.f32.gmra.mrb[0].mxu0 %v1221
  %v1223 = vpop.f32.mrb[0].mxu0
  %v1224 = vadd.f32 %v1057, %v1223
  %v1225 = vpop.f32.mrb[0].mxu0
  %1226 = vmatprep.mubr.f32.mxu0 0.0
  %v1227 = vand.u32 %v77, 4294901760
  %1228 = vmatmul.mubr.f32.gmra.mrb[0].mxu0 %v1227
  %v1229 = vpop.f32.mrb[0].mxu0
  %v1230 = vadd.f32 %v1063, %v1229
  %v1231 = vpop.f32.mrb[0].mxu0
  %1232 = vmatprep.mubr.f32.mxu0 0.0
  %v1233 = vand.u32 %v80, 4294901760
  %1234 = vmatmul.mubr.f32.gmra.mrb[0].mxu0 %v1233
  %v1235 = vpop.f32.mrb[0].mxu0
  %v1236 = vadd.f32 %v1069, %v1235
  %v1237 = vpop.f32.mrb[0].mxu0
  %1238 = vmatprep.mubr.f32.mxu0 0.0
  %v1239 = vand.u32 %v83, 4294901760
  %1240 = vmatmul.mubr.f32.gmra.mrb[0].mxu0 %v1239
  %v1241 = vpop.f32.mrb[0].mxu0
  %v1242 = vadd.f32 %v1075, %v1241
  %v1243 = vpop.f32.mrb[0].mxu0
  %1244 = vdwg.mxu0
  %v1245 = vld [vmem:[%s2] sm:$0x1]
  %v1247 = vlaneseq
  %v1248 = vshrl.u32 %v1247, 7
  %v1249 = vsub.s32 0, %v1248
  %v1250 = vrot.slane %v1245, %v1249
  %v1252 = vsub.f32 %v1152, %v1250
  %v1253 = vsub.f32 %v1158, %v1250
  %v1254 = vsub.f32 %v1164, %v1250
  %v1255 = vsub.f32 %v1170, %v1250
  %v1256 = vsub.f32 %v1176, %v1250
  %v1257 = vsub.f32 %v1182, %v1250
  %v1258 = vsub.f32 %v1188, %v1250
  %v1259 = vsub.f32 %v1194, %v1250
  %v1260 = vsub.f32 %v1200, %v1250
  %v1261 = vsub.f32 %v1206, %v1250
  %v1262 = vsub.f32 %v1212, %v1250
  %v1263 = vsub.f32 %v1218, %v1250
  %v1264 = vsub.f32 %v1224, %v1250
  %v1265 = vsub.f32 %v1230, %v1250
  %v1266 = vsub.f32 %v1236, %v1250
  %v1267 = vsub.f32 %v1242, %v1250
  %vm1268 = vcmask 80896
  %1269 = vst.msk [vmem:[%s3] sm:$0xff] %vm1268, %v1252
  %1270 = vst.msk [vmem:[%s3 + $0x8] sm:$0xff] %vm1268, %v1253
  %1271 = vst.msk [vmem:[%s3 + $0x10] sm:$0xff] %vm1268, %v1254
  %1272 = vst.msk [vmem:[%s3 + $0x18] sm:$0xff] %vm1268, %v1255
  %1273 = vst.msk [vmem:[%s3 + $0x20] sm:$0xff] %vm1268, %v1256
  %1274 = vst.msk [vmem:[%s3 + $0x28] sm:$0xff] %vm1268, %v1257
  %1275 = vst.msk [vmem:[%s3 + $0x30] sm:$0xff] %vm1268, %v1258
  %1276 = vst.msk [vmem:[%s3 + $0x38] sm:$0xff] %vm1268, %v1259
  %1277 = vst.msk [vmem:[%s3 + $0x40] sm:$0xff] %vm1268, %v1260
  %1278 = vst.msk [vmem:[%s3 + $0x48] sm:$0xff] %vm1268, %v1261
  %1279 = vst.msk [vmem:[%s3 + $0x50] sm:$0xff] %vm1268, %v1262
  %1280 = vst.msk [vmem:[%s3 + $0x58] sm:$0xff] %vm1268, %v1263
  %1281 = vst.msk [vmem:[%s3 + $0x60] sm:$0xff] %vm1268, %v1264
  %1282 = vst.msk [vmem:[%s3 + $0x68] sm:$0xff] %vm1268, %v1265
  %1283 = vst.msk [vmem:[%s3 + $0x70] sm:$0xff] %vm1268, %v1266
  %1284 = vst.msk [vmem:[%s3 + $0x78] sm:$0xff] %vm1268, %v1267
  // Predicated region
  $region14: #{matmul_sub_bias.1} parent=0 // pred_check
    _
  $region15: #{matmul_sub_bias.1} parent=0 // pred_check_branch
    %1286 = sbr.rel (0) target = $region17
  $region16: #{matmul_sub_bias.1} parent=0 // pred_region
    _
  $region17: #{matmul_sub_bias.1} parent=0 // pred_fallthru
    _
  // Predicated region
  $region18: #{matmul_sub_bias.1} parent=0 // pred_check
    _
  $region19: #{matmul_sub_bias.1} parent=0 // pred_check_branch
    %1288 = sbr.rel (0) target = $region21
  $region20: #{matmul_sub_bias.1} parent=0 // pred_region
    _
  $region21: #{matmul_sub_bias.1} parent=0 // pred_fallthru
    _

</llo_original>
